<compile_context>
chip_gen: v7x
topology: tpu7x:2x2x1
jax: 0.10.0
libtpu: 0.0.40
codegen_flags: <defaults>
</compile_context>

<pallas_src>
import math

import jax
import jax.numpy as jnp
from jax.experimental import pallas as pl
from jax.experimental.pallas import tpu as pltpu

# Keep the fused table / reference math in true f32 so everything agrees tightly.
jax.config.update("jax_default_matmul_precision", "highest")

block_size = 8      # max context length (positional table rows)
n_embed = 32
vocab_size = 65     # synthetic char vocab (e.g. Shakespeare charset size)
V_PAD = 128         # lane-dense padded vocab (last dim multiple of 128)
NEG_INF = -1e30
TARGET_ROWS = 2048  # rows per grid step (amortizes ~0.35us/step overhead)
LOSS_SUB = 8        # sublane-aligned per-block loss tile


# --------------------------------------------------------------------------- #
# Kernels
# --------------------------------------------------------------------------- #
def _block_logits(idx_ref, table_ref, pos_ref):
    """One-hot gather from the fused logit table + positional-logit add."""
    rows = idx_ref.shape[0]
    t = pos_ref.shape[0]
    ids = idx_ref[...]                                            # (rows, 1) i32
    col = jax.lax.broadcasted_iota(jnp.int32, (rows, V_PAD), 1)
    onehot = (col == ids).astype(jnp.float32)                     # (rows, 128)
    # Exact row-select via MXU (HIGHEST precision -> no bf16 rounding of table).
    logits = jnp.dot(onehot, table_ref[...],
                     preferred_element_type=jnp.float32,
                     precision=jax.lax.Precision.HIGHEST)         # (rows, 128)
    logits = (logits.reshape(rows // t, t, V_PAD) + pos_ref[...]) \
        .reshape(rows, V_PAD)
    return col, logits


def _block_nll_sum(col, logits, tgt_ref):
    """Sum of per-row cross-entropy NLL for this block (padded cols are -1e30)."""
    tgt = tgt_ref[...]                                            # (rows, 1) i32
    m = jnp.max(logits, axis=-1, keepdims=True)
    lse = m + jnp.log(jnp.sum(jnp.exp(logits - m), axis=-1, keepdims=True))
    tgt_logit = jnp.sum(jnp.where(col == tgt, logits, 0.0),
                        axis=-1, keepdims=True)                   # select-gather
    return jnp.sum(lse - tgt_logit)


def logits_kernel(idx_ref, table_ref, pos_ref, logits_ref):
    _, logits = _block_logits(idx_ref, table_ref, pos_ref)
    logits_ref[...] = logits.astype(logits_ref.dtype)


def logits_loss_kernel(idx_ref, tgt_ref, table_ref, pos_ref,
                       logits_ref, loss_ref):
    col, logits = _block_logits(idx_ref, table_ref, pos_ref)
    logits_ref[...] = logits.astype(logits_ref.dtype)
    nll = _block_nll_sum(col, logits, tgt_ref)
    loss_ref[...] = jnp.broadcast_to(nll, loss_ref.shape)


def loss_kernel(idx_ref, tgt_ref, table_ref, pos_ref, loss_ref):
    col, logits = _block_logits(idx_ref, table_ref, pos_ref)
    nll = _block_nll_sum(col, logits, tgt_ref)
    loss_ref[...] = jnp.broadcast_to(nll, loss_ref.shape)


# --------------------------------------------------------------------------- #
# Params
# --------------------------------------------------------------------------- #
def init_params(key):
    k1, k2, k3, k4 = jax.random.split(key, 4)
    return {
        # nn.Embedding(vocab_size, n_embed)
        "tok_emb": jax.random.normal(k1, (vocab_size, n_embed), jnp.float32),
        # nn.Embedding(block_size, n_embed)
        "pos_emb": jax.random.normal(k2, (block_size, n_embed), jnp.float32),
        # nn.Linear(n_embed, vocab_size): weight (V, E), bias (V,)
        "w": jax.random.normal(k3, (vocab_size, n_embed), jnp.float32) * 0.1,
        "b": jax.random.normal(k4, (vocab_size,), jnp.float32) * 0.1,
    }


def pack_params(params):
    """One-time algebraic fusion (hoisted out of forward).

    table[v, :]      = tok_emb[v] @ W.T + b          (padded cols = -1e30)
    pos_logits[t, :] = pos_emb[t] @ W.T              (padded cols = 0)
    so logits[row] = table[idx[row]] + pos_logits[row % T].
    """
    w_t = params["w"].T                                           # (E, V)
    table = params["tok_emb"] @ w_t + params["b"][None, :]        # (V, V)
    pos_logits = params["pos_emb"] @ w_t                          # (T_max, V)

    table_pad = jnp.full((V_PAD, V_PAD), NEG_INF, jnp.float32)
    table_pad = table_pad.at[:, :vocab_size].set(0.0)
    table_pad = table_pad.at[:vocab_size, :vocab_size].set(table)

    pos_pad = jnp.zeros((block_size, V_PAD), jnp.float32)
    pos_pad = pos_pad.at[:, :vocab_size].set(pos_logits)
    return {"table": table_pad, "pos_logits": pos_pad}


# --------------------------------------------------------------------------- #
# Forward wrapper
# --------------------------------------------------------------------------- #
def _rows_per_block(BT, T):
    """Largest divisor of BT that is a multiple of lcm(8, T) and <= TARGET_ROWS."""
    if BT <= TARGET_ROWS:
        return BT                       # single block: block == full array, always legal
    unit = 8 * T // math.gcd(8, T)
    best = None
    for r in range(unit, TARGET_ROWS + 1, unit):
        if BT % r == 0:
            best = r
    # Fallback: one big block (correct; only VMEM-heavy for pathological BT).
    return best if best is not None else BT


def forward(packed, idx, targets=None, *, return_logits=True,
            slice_logits=True, logits_dtype=jnp.float32):
    """Matches BigramLanguageModel.forward.

    targets=None          -> ((B, T, C) logits, None)
    targets given         -> ((B*T, C) logits, scalar mean CE)  [torch semantics]
    return_logits=False   -> (None, scalar mean CE)  [loss-only fast path]
    slice_logits=False    -> returns padded (.., 128) logits (padded cols = -1e30)
    """
    B, T = idx.shape
    BT = B * T
    rows = _rows_per_block(BT, T)
    nb = BT // rows
    grid = (nb,)

    idx2 = idx.reshape(BT, 1).astype(jnp.int32)
    pos = packed["pos_logits"][:T]                                # (T, 128)

    idx_spec = pl.BlockSpec((rows, 1), lambda i: (i, 0))
    tgt_spec = pl.BlockSpec((rows, 1), lambda i: (i, 0))
    table_spec = pl.BlockSpec((V_PAD, V_PAD), lambda i: (0, 0))
    pos_spec = pl.BlockSpec((T, V_PAD), lambda i: (0, 0))
    logits_spec = pl.BlockSpec((rows, V_PAD), lambda i: (i, 0))
    loss_spec = pl.BlockSpec((1, LOSS_SUB, V_PAD), lambda i: (i, 0, 0))

    cparams = pltpu.CompilerParams(
        dimension_semantics=("parallel",),          # no cross-block state
        vmem_limit_bytes=32 * 1024 * 1024)

    if targets is None:
        logits_pad = pl.pallas_call(
            logits_kernel,
            grid=grid,
            in_specs=[idx_spec, table_spec, pos_spec],
            out_specs=logits_spec,
            out_shape=jax.ShapeDtypeStruct((BT, V_PAD), logits_dtype),
            compiler_params=cparams,
        )(idx2, packed["table"], pos)
        logits = logits_pad[:, :vocab_size] if slice_logits else logits_pad
        return logits.reshape(B, T, -1), None

    tgt2 = targets.reshape(BT, 1).astype(jnp.int32)

    if not return_logits:
        loss_parts = pl.pallas_call(
            loss_kernel,
            grid=grid,
            in_specs=[idx_spec, tgt_spec, table_spec, pos_spec],
            out_specs=loss_spec,
            out_shape=jax.ShapeDtypeStruct((nb, LOSS_SUB, V_PAD), jnp.float32),
            compiler_params=cparams,
        )(idx2, tgt2, packed["table"], pos)
        return None, jnp.sum(loss_parts[:, 0, 0]) / BT

    logits_pad, loss_parts = pl.pallas_call(
        logits_loss_kernel,
        grid=grid,
        in_specs=[idx_spec, tgt_spec, table_spec, pos_spec],
        out_specs=(logits_spec, loss_spec),
        out_shape=(jax.ShapeDtypeStruct((BT, V_PAD), logits_dtype),
                   jax.ShapeDtypeStruct((nb, LOSS_SUB, V_PAD), jnp.float32)),
        compiler_params=cparams,
    )(idx2, tgt2, packed["table"], pos)
    loss = jnp.sum(loss_parts[:, 0, 0]) / BT
    logits = logits_pad[:, :vocab_size] if slice_logits else logits_pad
    return logits, loss


# TODO(synk): generate()'s torch.multinomial autoregressive sampling loop stays a
# host-side loop around forward(); it is not expressed as a Pallas kernel here.


# --------------------------------------------------------------------------- #
# Pure-JAX reference + test
# --------------------------------------------------------------------------- #
def reference_forward(params, idx, targets):
    B, T = idx.shape
    tok = params["tok_emb"][idx]                 # (B, T, E)
    pos = params["pos_emb"][:T]                  # (T, E)
    x = tok + pos[None]
    logits = x @ params["w"].T + params["b"]     # (B, T, V)
    logits = logits.reshape(B * T, vocab_size)
    logp = jax.nn.log_softmax(logits, axis=-1)
    nll = -jnp.take_along_axis(logp, targets.reshape(-1, 1), axis=-1)[:, 0]
    return logits, jnp.mean(nll)


if __name__ == "__main__":
    key = jax.random.PRNGKey(0)
    pkey, ikey, tkey = jax.random.split(key, 3)
    params = init_params(pkey)
    packed = pack_params(params)                 # one-time fused logit table

    B, T = 2, block_size
    idx = jax.random.randint(ikey, (B, T), 0, vocab_size, dtype=jnp.int32)
    targets = jax.random.randint(tkey, (B, T), 0, vocab_size, dtype=jnp.int32)

    # forward with targets: (B*T, V) logits + scalar mean CE loss
    logits, loss = forward(packed, idx, targets)
    jax.block_until_ready((logits, loss))

    # loss-only training fast path (no logits writeback)
    _, loss_only = forward(packed, idx, targets, return_logits=False)
    jax.block_until_ready(loss_only)

    # forward without targets: (B, T, V) logits, loss None
    logits_nt, loss_nt = forward(packed, idx, None)
    jax.block_until_ready(logits_nt)
    assert loss_nt is None and logits_nt.shape == (B, T, vocab_size)

    # correctness vs pure-JAX reference
    ref_logits, ref_loss = reference_forward(params, idx, targets)
    assert jnp.allclose(logits, ref_logits, atol=1e-4, rtol=1e-4)
    assert jnp.allclose(logits_nt.reshape(B * T, vocab_size), ref_logits,
                        atol=1e-4, rtol=1e-4)
    assert jnp.allclose(loss, ref_loss, atol=1e-4, rtol=1e-4)
    assert jnp.allclose(loss_only, ref_loss, atol=1e-4, rtol=1e-4)

    print("KERNEL_OK")
</pallas_src>

<mosaic_0001>
module attributes {stable_mosaic.version = 11 : i64} {
  func.func @logits_loss_kernel(%arg0: i32, %arg1: memref<16x1xi32, #tpu.memory_space<vmem>>, %arg2: memref<16x1xi32, #tpu.memory_space<vmem>>, %arg3: memref<128x128xf32, #tpu.memory_space<vmem>>, %arg4: memref<8x128xf32, #tpu.memory_space<vmem>>, %arg5: memref<16x128xf32, #tpu.memory_space<vmem>>, %arg6: memref<1x8x128xf32, #tpu.memory_space<vmem>>) attributes {dimension_semantics = [#tpu.dimension_semantics<parallel>], iteration_bounds = array<i64: 1>, scalar_prefetch = 0 : i64, scratch_operands = 0 : i64, tpu.core_type = #tpu.core_type<tc>, window_params = [{transform_indices = @transform_0, window_bounds = array<i64: 16, 1>}, {transform_indices = @transform_1, window_bounds = array<i64: 16, 1>}, {pipeline_mode = #tpu.pipeline_mode<synchronous>, transform_indices = @transform_2, window_bounds = array<i64: 128, 128>}, {pipeline_mode = #tpu.pipeline_mode<synchronous>, transform_indices = @transform_3, window_bounds = array<i64: 8, 128>}, {transform_indices = @transform_4, window_bounds = array<i64: 16, 128>}, {transform_indices = @transform_5, window_bounds = array<i64: 1, 8, 128>}]} {
    %c0 = arith.constant 0 : index
    %c0_0 = arith.constant 0 : index
    %0 = vector.load %arg1[%c0, %c0_0] : memref<16x1xi32, #tpu.memory_space<vmem>>, vector<16x1xi32>
    %1 = tpu.iota {dimensions = array<i32: 1>} : vector<16x128xi32>
    %2 = vector.broadcast %0 : vector<16x1xi32> to vector<16x128xi32>
    %3 = arith.cmpi eq, %1, %2 : vector<16x128xi32>
    %4 = arith.extui %3 : vector<16x128xi1> to vector<16x128xi32>
    %5 = arith.sitofp %4 : vector<16x128xi32> to vector<16x128xf32>
    %c0_1 = arith.constant 0 : index
    %c0_2 = arith.constant 0 : index
    %6 = vector.load %arg3[%c0_1, %c0_2] : memref<128x128xf32, #tpu.memory_space<vmem>>, vector<128x128xf32>
    %cst = arith.constant dense<0.000000e+00> : vector<16x128xf32>
    %7 = tpu.matmul %5, %6, %cst {dimension_numbers = #tpu.dot_dimension_numbers<[1], [0], [0], [1], [0, 0, 1, 1], [], []>, precision = #tpu.contract_precision<fp32>} : vector<16x128xf32>, vector<128x128xf32>, vector<16x128xf32> -> vector<16x128xf32>
    %8 = vector.shape_cast %7 : vector<16x128xf32> to vector<2x8x128xf32>
    %c0_3 = arith.constant 0 : index
    %c0_4 = arith.constant 0 : index
    %9 = vector.load %arg4[%c0_3, %c0_4] : memref<8x128xf32, #tpu.memory_space<vmem>>, vector<8x128xf32>
    %10 = vector.shape_cast %9 : vector<8x128xf32> to vector<1x8x128xf32>
    %11 = vector.broadcast %10 : vector<1x8x128xf32> to vector<2x8x128xf32>
    %12 = arith.addf %8, %11 : vector<2x8x128xf32>
    %13 = vector.shape_cast %12 : vector<2x8x128xf32> to vector<16x128xf32>
    %c0_5 = arith.constant 0 : index
    %c0_6 = arith.constant 0 : index
    %14 = vector.load %arg5[%c0_5, %c0_6] : memref<16x128xf32, #tpu.memory_space<vmem>>, vector<16x128xf32>
    tpu.vector_store %arg5[%c0_5, %c0_6], %13 {strides = array<i32>} : memref<16x128xf32, #tpu.memory_space<vmem>>, vector<16x128xf32>,
    %c0_7 = arith.constant 0 : index
    %c0_8 = arith.constant 0 : index
    %15 = vector.load %arg2[%c0_7, %c0_8] : memref<16x1xi32, #tpu.memory_space<vmem>>, vector<16x1xi32>
    %cst_9 = arith.constant dense<0xFF800000> : vector<16xf32>
    %16 = vector.multi_reduction <maximumf>, %13, %cst_9 [1] : vector<16x128xf32> to vector<16xf32>
    %17 = vector.shape_cast %16 : vector<16xf32> to vector<16x1xf32>
    %18 = vector.broadcast %17 : vector<16x1xf32> to vector<16x128xf32>
    %19 = arith.subf %13, %18 : vector<16x128xf32>
    %20 = math.exp %19 : vector<16x128xf32>
    %cst_10 = arith.constant dense<0.000000e+00> : vector<16xf32>
    %21 = vector.multi_reduction <add>, %20, %cst_10 [1] : vector<16x128xf32> to vector<16xf32>
    %22 = vector.shape_cast %21 : vector<16xf32> to vector<16x1xf32>
    %23 = math.log %22 : vector<16x1xf32>
    %24 = arith.addf %17, %23 : vector<16x1xf32>
    %25 = vector.broadcast %15 : vector<16x1xi32> to vector<16x128xi32>
    %26 = arith.cmpi eq, %1, %25 : vector<16x128xi32>
    %cst_11 = arith.constant 0.000000e+00 : f32
    %27 = vector.broadcast %cst_11 : f32 to vector<16x128xf32>
    %28 = arith.select %26, %13, %27 : vector<16x128xi1>, vector<16x128xf32>
    %cst_12 = arith.constant dense<0.000000e+00> : vector<16xf32>
    %29 = vector.multi_reduction <add>, %28, %cst_12 [1] : vector<16x128xf32> to vector<16xf32>
    %30 = vector.shape_cast %29 : vector<16xf32> to vector<16x1xf32>
    %31 = arith.subf %24, %30 : vector<16x1xf32>
    %32 = vector.shape_cast %31 : vector<16x1xf32> to vector<1x16x1xf32>
    %cst_13 = arith.constant dense<0.000000e+00> : vector<1xf32>
    %33 = vector.multi_reduction <add>, %32, %cst_13 [1, 2] : vector<1x16x1xf32> to vector<1xf32>
    %34 = vector.shape_cast %33 : vector<1xf32> to vector<1x1x1xf32>
    %35 = vector.extract %34[0, 0, 0] : f32 from vector<1x1x1xf32>
    %36 = vector.broadcast %35 : f32 to vector<1x8x128xf32>
    %c0_14 = arith.constant 0 : index
    %c0_15 = arith.constant 0 : index
    %c0_16 = arith.constant 0 : index
    %37 = vector.load %arg6[%c0_14, %c0_15, %c0_16] : memref<1x8x128xf32, #tpu.memory_space<vmem>>, vector<1x8x128xf32>
    tpu.vector_store %arg6[%c0_14, %c0_15, %c0_16], %36 {strides = array<i32>} : memref<1x8x128xf32, #tpu.memory_space<vmem>>, vector<1x8x128xf32>,
    return
  }
  func.func @transform_0(%arg0: i32) -> (i32, i32) {
    %c0_i32 = arith.constant 0 : i32
    %c0_i32_0 = arith.constant 0 : i32
    return %arg0, %c0_i32 : i32, i32
  }
  func.func @transform_1(%arg0: i32) -> (i32, i32) {
    %c0_i32 = arith.constant 0 : i32
    %c0_i32_0 = arith.constant 0 : i32
    return %arg0, %c0_i32 : i32, i32
  }
  func.func @transform_2(%arg0: i32) -> (i32, i32) {
    %c0_i32 = arith.constant 0 : i32
    %c0_i32_0 = arith.constant 0 : i32
    %c0_i32_1 = arith.constant 0 : i32
    return %c0_i32, %c0_i32_0 : i32, i32
  }
  func.func @transform_3(%arg0: i32) -> (i32, i32) {
    %c0_i32 = arith.constant 0 : i32
    %c0_i32_0 = arith.constant 0 : i32
    %c0_i32_1 = arith.constant 0 : i32
    return %c0_i32, %c0_i32_0 : i32, i32
  }
  func.func @transform_4(%arg0: i32) -> (i32, i32) {
    %c0_i32 = arith.constant 0 : i32
    %c0_i32_0 = arith.constant 0 : i32
    return %arg0, %c0_i32 : i32, i32
  }
  func.func @transform_5(%arg0: i32) -> (i32, i32, i32) {
    %c0_i32 = arith.constant 0 : i32
    %c0_i32_0 = arith.constant 0 : i32
    %c0_i32_1 = arith.constant 0 : i32
    return %arg0, %c0_i32, %c0_i32_0 : i32, i32, i32
  }
}

</mosaic_0001>

<llo_original>
// kernel: tpu_custom_call.1
$region0: #{tpu_custom_call.1}
  #allocation0 [shape = 'u32[]', space=smem, size = 0x4, offset = 0x4, fixed_abs, tag = 'smem constant byte address 0x4 - core index']
  #allocation1 [shape = 'u32[144,128]{1,0:T(1,128)}', space=vmem, size = 0x12000, scoped, tag = 'internal scratch']
  %s0 = inlined_call_operand.vmem [shape: s32[16,1], index: 0, kind: input, shape index: {}]
  %s1 = inlined_call_operand.vmem [shape: s32[16,1], index: 1, kind: input, shape index: {}]
  %s2 = inlined_call_operand.hbm [shape: f32[128,128], index: 2, kind: input, shape index: {}]
  %s3 = inlined_call_operand.vmem [shape: f32[8,128], index: 3, kind: input, shape index: {}]
  %s4 = inlined_call_operand.hbm [shape: f32[16,128], index: 4, kind: output, shape index: {0}]
  %s5 = inlined_call_operand.hbm [shape: f32[1,8,128], index: 5, kind: output, shape index: {1}]
  %6 = xla_tuple %s4, %s5
  %s7 = sld [smem:[#allocation0]]
  $region38: #{tpu_custom_call.1} parent=0
    _
  %s9 = ssub.s32 1, %s7
  %s10 = scalar_select 0, %s9, %s7
  $region1: #{tpu_custom_call.1} parent=0
    #allocation2 [shape = 'u8[65536]{0}', space=vmem, size = 0x10000, scoped, tag = 'input window, operand 2, single buffered']
    #allocation3 [shape = 's32[1]{0}', space=sflag, size = 0x4, scoped, tag = 'scoped memory for tpu_custom_call.1']
    #allocation4 [shape = 's32[1]{0}', space=sflag, size = 0x4, scoped, tag = 'scoped memory for tpu_custom_call.1']
    #allocation5 [shape = 'u8[8192]{0}', space=vmem, size = 0x2000, scoped, tag = 'output window, operand 0, single buffered']
    #allocation6 [shape = 'u8[4096]{0}', space=vmem, size = 0x1000, scoped, tag = 'output window, operand 1, single buffered']
    #allocation7 [shape = 's32[1]{0}', space=sflag, size = 0x4, scoped, tag = 'scoped memory for tpu_custom_call.1']
    %11 = vsyncpa [#allocation3], 0
    %12 = vsyncpa [#allocation4], 0
    %13 = vsyncpa [#allocation7], 0
    // Predicated region
    $region2: #{tpu_custom_call.1} parent=1 // pred_check
      _
    $region3: #{tpu_custom_call.1} parent=1 // pred_check_branch
      %15 = sbr.rel (0) target = $region5
    $region4: #{tpu_custom_call.1} parent=1 // pred_region
      _
    $region5: #{tpu_custom_call.1} parent=1 // pred_fallthru
      _
    // Predicated region
    $region6: #{tpu_custom_call.1} parent=1 // pred_check
      _
    $region7: #{tpu_custom_call.1} parent=1 // pred_check_branch
      %17 = sbr.rel (0) target = $region9
    $region8: #{tpu_custom_call.1} parent=1 // pred_region
      _
    $region9: #{tpu_custom_call.1} parent=1 // pred_fallthru
      _
    // Predicated region
    $region10: #{tpu_custom_call.1} parent=1 // pred_check
      _
    $region11: #{tpu_custom_call.1} parent=1 // pred_check_branch
      %19 = sbr.rel (0) target = $region13
    $region12: #{tpu_custom_call.1} parent=1 // pred_region
      %s21 = ssub.s32 2048, 2048
      %22 = vsyncadd [#allocation3], %s21
      %s23 = sshll.u32 [#allocation2], 4
      %s24 = int_to_ptr.vmem [resolvable:$true] %s23
      %29 = dma.hbm_to_vmem [thread:$0]  %s2, 2048, %s24, [#allocation3], 128, 128, 8
    $region13: #{tpu_custom_call.1} parent=1 // pred_fallthru
      _
    // Predicated region
    $region14: #{tpu_custom_call.1} parent=1 // pred_check
      _
    $region15: #{tpu_custom_call.1} parent=1 // pred_check_branch
      %31 = sbr.rel (0) target = $region17
    $region16: #{tpu_custom_call.1} parent=1 // pred_region
      _
    $region17: #{tpu_custom_call.1} parent=1 // pred_fallthru
      _
    // Predicated region
    $region18: #{tpu_custom_call.1} parent=1 // pred_check
      _
    $region19: #{tpu_custom_call.1} parent=1 // pred_check_branch
      %33 = sbr.rel (0) target = $region21
    $region20: #{tpu_custom_call.1} parent=1 // pred_region
      %34 = dma.done [#allocation3], 2048
    $region21: #{tpu_custom_call.1} parent=1 // pred_fallthru
      _
    %v35 = vld [vmem:[%s0] sm:$0xff]
    %v36 = vld [vmem:[%s0 + $0x8] sm:$0xff]
    %v37 = vlaneseq
    %v38 = vand.u32 %v37, 127
    %39 = vset.pattern.permute.xlu0 0
    %40 = vperm.xlu0 %39, %v35
    %v41 = vpop.permute.xlu0 %40
    %42 = vset.pattern.permute.xlu0 0
    %43 = vperm.xlu0 %42, %v36
    %v44 = vpop.permute.xlu0 %43
    %vm45 = vcmp.eq.s32.totalorder %v38, %v41
    %vm46 = vcmp.eq.s32.totalorder %v38, %v44
    %v47 = vsel %vm45, 1, 0
    %v48 = vsel %vm46, 1, 0
    %v49 = vcvt.s32.f32 %v47
    %v50 = vcvt.s32.f32 %v48
    %v51 = vld [vmem:[#allocation2] sm:$0xff]
    %v52 = vld [vmem:[#allocation2 + $0x8] sm:$0xff]
    %v53 = vld [vmem:[#allocation2 + $0x10] sm:$0xff]
    %v54 = vld [vmem:[#allocation2 + $0x18] sm:$0xff]
    %v55 = vld [vmem:[#allocation2 + $0x20] sm:$0xff]
    %v56 = vld [vmem:[#allocation2 + $0x28] sm:$0xff]
    %v57 = vld [vmem:[#allocation2 + $0x30] sm:$0xff]
    %v58 = vld [vmem:[#allocation2 + $0x38] sm:$0xff]
    %v59 = vld [vmem:[#allocation2 + $0x40] sm:$0xff]
    %v60 = vld [vmem:[#allocation2 + $0x48] sm:$0xff]
    %v61 = vld [vmem:[#allocation2 + $0x50] sm:$0xff]
    %v62 = vld [vmem:[#allocation2 + $0x58] sm:$0xff]
    %v63 = vld [vmem:[#allocation2 + $0x60] sm:$0xff]
    %v64 = vld [vmem:[#allocation2 + $0x68] sm:$0xff]
    %v65 = vld [vmem:[#allocation2 + $0x70] sm:$0xff]
    %v66 = vld [vmem:[#allocation2 + $0x78] sm:$0xff]
    %67 = vmatprep.subr.mxu0 0.0
    %v68 = vand.u32 %v51, 4294901760
    %69 = vmatpush1.msra.mxu0 %v68
    %70 = vmatprep.subr.mxu0 0.0
    %v71 = vand.u32 %v52, 4294901760
    %72 = vmatpush1.msra.mxu0 %v71
    %73 = vmatprep.subr.mxu0 0.0
    %v74 = vand.u32 %v53, 4294901760
    %75 = vmatpush1.msra.mxu0 %v74
    %76 = vmatprep.subr.mxu0 0.0
    %v77 = vand.u32 %v54, 4294901760
    %78 = vmatpush1.msra.mxu0 %v77
    %79 = vmatprep.subr.mxu0 0.0
    %v80 = vand.u32 %v55, 4294901760
    %81 = vmatpush1.msra.mxu0 %v80
    %82 = vmatprep.subr.mxu0 0.0
    %v83 = vand.u32 %v56, 4294901760
    %84 = vmatpush1.msra.mxu0 %v83
    %85 = vmatprep.subr.mxu0 0.0
    %v86 = vand.u32 %v57, 4294901760
    %87 = vmatpush1.msra.mxu0 %v86
    %88 = vmatprep.subr.mxu0 0.0
    %v89 = vand.u32 %v58, 4294901760
    %90 = vmatpush1.msra.mxu0 %v89
    %91 = vmatprep.subr.mxu0 0.0
    %v92 = vand.u32 %v59, 4294901760
    %93 = vmatpush1.msra.mxu0 %v92
    %94 = vmatprep.subr.mxu0 0.0
    %v95 = vand.u32 %v60, 4294901760
    %96 = vmatpush1.msra.mxu0 %v95
    %97 = vmatprep.subr.mxu0 0.0
    %v98 = vand.u32 %v61, 4294901760
    %99 = vmatpush1.msra.mxu0 %v98
    %100 = vmatprep.subr.mxu0 0.0
    %v101 = vand.u32 %v62, 4294901760
    %102 = vmatpush1.msra.mxu0 %v101
    %103 = vmatprep.subr.mxu0 0.0
    %v104 = vand.u32 %v63, 4294901760
    %105 = vmatpush1.msra.mxu0 %v104
    %106 = vmatprep.subr.mxu0 0.0
    %v107 = vand.u32 %v64, 4294901760
    %108 = vmatpush1.msra.mxu0 %v107
    %109 = vmatprep.subr.mxu0 0.0
    %v110 = vand.u32 %v65, 4294901760
    %111 = vmatpush1.msra.mxu0 %v110
    %112 = vmatprep.subr.mxu0 0.0
    %v113 = vand.u32 %v66, 4294901760
    %114 = vmatpush1.msra.mxu0 %v113
    %115 = vmatprep.subr.mxu0 0.0
    %116 = vmatpush1.msra.mxu0 0.0
    %117 = vmatprep.subr.mxu0 0.0
    %118 = vmatpush1.msra.mxu0 0.0
    %119 = vmatprep.subr.mxu0 0.0
    %120 = vmatpush1.msra.mxu0 0.0
    %121 = vmatprep.subr.mxu0 0.0
    %122 = vmatpush1.msra.mxu0 0.0
    %123 = vmatprep.subr.mxu0 0.0
    %124 = vmatpush1.msra.mxu0 0.0
    %125 = vmatprep.subr.mxu0 0.0
    %126 = vmatpush1.msra.mxu0 0.0
    %127 = vmatprep.subr.mxu0 0.0
    %128 = vmatpush1.msra.mxu0 0.0
    %129 = vmatprep.subr.mxu0 0.0
    %130 = vmatpush1.msra.mxu0 0.0
    %131 = vmatprep.subr.mxu0 0.0
    %132 = vmatpush1.msra.mxu0 0.0
    %133 = vmatprep.subr.mxu0 0.0
    %134 = vmatpush1.msra.mxu0 0.0
    %135 = vmatprep.subr.mxu0 0.0
    %136 = vmatpush1.msra.mxu0 0.0
    %137 = vmatprep.subr.mxu0 0.0
    %138 = vmatpush1.msra.mxu0 0.0
    %139 = vmatprep.subr.mxu0 0.0
    %140 = vmatpush1.msra.mxu0 0.0
    %141 = vmatprep.subr.mxu0 0.0
    %142 = vmatpush1.msra.mxu0 0.0
    %143 = vmatprep.subr.mxu0 0.0
    %144 = vmatpush1.msra.mxu0 0.0
    %145 = vmatprep.subr.mxu0 0.0
    %146 = vmatpush1.msra.mxu0 0.0
    %147 = vmatprep.mubr.f32.mxu0 0.0
    %v148 = vand.u32 %v49, 4294901760
    %v149 = vsub.f32 %v49, %v148
    %v150 = vand.u32 %v149, 4294901760
    %v151 = vsub.f32 %v149, %v150
    %v152 = vand.u32 %v151, 4294901760
    %153 = vmatmul.mubr.f32.gmra.mrb[0].mxu0 %v152
    %v154 = vpop.f32.mrb[0].mxu0
    %v155 = vadd.f32 0.0, %v154
    %v156 = vpop.f32.mrb[0].mxu0
    %157 = vmatprep.mubr.f32.mxu0 0.0
    %v158 = vand.u32 %v50, 4294901760
    %v159 = vsub.f32 %v50, %v158
    %v160 = vand.u32 %v159, 4294901760
    %v161 = vsub.f32 %v159, %v160
    %v162 = vand.u32 %v161, 4294901760
    %163 = vmatmul.mubr.f32.gmra.mrb[0].mxu0 %v162
    %v164 = vpop.f32.mrb[0].mxu0
    %v165 = vadd.f32 0.0, %v164
    %v166 = vpop.f32.mrb[0].mxu0
    %167 = vdwg.mxu0
    %168 = vmatprep.subr.mxu0 0.0
    %v169 = vand.u32 %v51, 4294901760
    %v170 = vsub.f32 %v51, %v169
    %v171 = vand.u32 %v170, 4294901760
    %v172 = vsub.f32 %v170, %v171
    %v173 = vand.u32 %v172, 4294901760
    %174 = vmatpush1.msra.mxu0 %v173
    %175 = vmatprep.subr.mxu0 0.0
    %v176 = vand.u32 %v52, 4294901760
    %v177 = vsub.f32 %v52, %v176
    %v178 = vand.u32 %v177, 4294901760
    %v179 = vsub.f32 %v177, %v178
    %v180 = vand.u32 %v179, 4294901760
    %181 = vmatpush1.msra.mxu0 %v180
    %182 = vmatprep.subr.mxu0 0.0
    %v183 = vand.u32 %v53, 4294901760
    %v184 = vsub.f32 %v53, %v183
    %v185 = vand.u32 %v184, 4294901760
    %v186 = vsub.f32 %v184, %v185
    %v187 = vand.u32 %v186, 4294901760
    %188 = vmatpush1.msra.mxu0 %v187
    %189 = vmatprep.subr.mxu0 0.0
    %v190 = vand.u32 %v54, 4294901760
    %v191 = vsub.f32 %v54, %v190
    %v192 = vand.u32 %v191, 4294901760
    %v193 = vsub.f32 %v191, %v192
    %v194 = vand.u32 %v193, 4294901760
    %195 = vmatpush1.msra.mxu0 %v194
    %196 = vmatprep.subr.mxu0 0.0
    %v197 = vand.u32 %v55, 4294901760
    %v198 = vsub.f32 %v55, %v197
    %v199 = vand.u32 %v198, 4294901760
    %v200 = vsub.f32 %v198, %v199
    %v201 = vand.u32 %v200, 4294901760
    %202 = vmatpush1.msra.mxu0 %v201
    %203 = vmatprep.subr.mxu0 0.0
    %v204 = vand.u32 %v56, 4294901760
    %v205 = vsub.f32 %v56, %v204
    %v206 = vand.u32 %v205, 4294901760
    %v207 = vsub.f32 %v205, %v206
    %v208 = vand.u32 %v207, 4294901760
    %209 = vmatpush1.msra.mxu0 %v208
    %210 = vmatprep.subr.mxu0 0.0
    %v211 = vand.u32 %v57, 4294901760
    %v212 = vsub.f32 %v57, %v211
    %v213 = vand.u32 %v212, 4294901760
    %v214 = vsub.f32 %v212, %v213
    %v215 = vand.u32 %v214, 4294901760
    %216 = vmatpush1.msra.mxu0 %v215
    %217 = vmatprep.subr.mxu0 0.0
    %v218 = vand.u32 %v58, 4294901760
    %v219 = vsub.f32 %v58, %v218
    %v220 = vand.u32 %v219, 4294901760
    %v221 = vsub.f32 %v219, %v220
    %v222 = vand.u32 %v221, 4294901760
    %223 = vmatpush1.msra.mxu0 %v222
    %224 = vmatprep.subr.mxu0 0.0
    %v225 = vand.u32 %v59, 4294901760
    %v226 = vsub.f32 %v59, %v225
    %v227 = vand.u32 %v226, 4294901760
    %v228 = vsub.f32 %v226, %v227
    %v229 = vand.u32 %v228, 4294901760
    %230 = vmatpush1.msra.mxu0 %v229
    %231 = vmatprep.subr.mxu0 0.0
    %v232 = vand.u32 %v60, 4294901760
    %v233 = vsub.f32 %v60, %v232
    %v234 = vand.u32 %v233, 4294901760
    %v235 = vsub.f32 %v233, %v234
    %v236 = vand.u32 %v235, 4294901760
    %237 = vmatpush1.msra.mxu0 %v236
    %238 = vmatprep.subr.mxu0 0.0
    %v239 = vand.u32 %v61, 4294901760
    %v240 = vsub.f32 %v61, %v239
    %v241 = vand.u32 %v240, 4294901760
    %v242 = vsub.f32 %v240, %v241
    %v243 = vand.u32 %v242, 4294901760
    %244 = vmatpush1.msra.mxu0 %v243
    %245 = vmatprep.subr.mxu0 0.0
    %v246 = vand.u32 %v62, 4294901760
    %v247 = vsub.f32 %v62, %v246
    %v248 = vand.u32 %v247, 4294901760
    %v249 = vsub.f32 %v247, %v248
    %v250 = vand.u32 %v249, 4294901760
    %251 = vmatpush1.msra.mxu0 %v250
    %252 = vmatprep.subr.mxu0 0.0
    %v253 = vand.u32 %v63, 4294901760
    %v254 = vsub.f32 %v63, %v253
    %v255 = vand.u32 %v254, 4294901760
    %v256 = vsub.f32 %v254, %v255
    %v257 = vand.u32 %v256, 4294901760
    %258 = vmatpush1.msra.mxu0 %v257
    %259 = vmatprep.subr.mxu0 0.0
    %v260 = vand.u32 %v64, 4294901760
    %v261 = vsub.f32 %v64, %v260
    %v262 = vand.u32 %v261, 4294901760
    %v263 = vsub.f32 %v261, %v262
    %v264 = vand.u32 %v263, 4294901760
    %265 = vmatpush1.msra.mxu0 %v264
    %266 = vmatprep.subr.mxu0 0.0
    %v267 = vand.u32 %v65, 4294901760
    %v268 = vsub.f32 %v65, %v267
    %v269 = vand.u32 %v268, 4294901760
    %v270 = vsub.f32 %v268, %v269
    %v271 = vand.u32 %v270, 4294901760
    %272 = vmatpush1.msra.mxu0 %v271
    %273 = vmatprep.subr.mxu0 0.0
    %v274 = vand.u32 %v66, 4294901760
    %v275 = vsub.f32 %v66, %v274
    %v276 = vand.u32 %v275, 4294901760
    %v277 = vsub.f32 %v275, %v276
    %v278 = vand.u32 %v277, 4294901760
    %279 = vmatpush1.msra.mxu0 %v278
    %280 = vmatprep.subr.mxu0 0.0
    %281 = vmatpush1.msra.mxu0 0.0
    %282 = vmatprep.subr.mxu0 0.0
    %283 = vmatpush1.msra.mxu0 0.0
    %284 = vmatprep.subr.mxu0 0.0
    %285 = vmatpush1.msra.mxu0 0.0
    %286 = vmatprep.subr.mxu0 0.0
    %287 = vmatpush1.msra.mxu0 0.0
    %288 = vmatprep.subr.mxu0 0.0
    %289 = vmatpush1.msra.mxu0 0.0
    %290 = vmatprep.subr.mxu0 0.0
    %291 = vmatpush1.msra.mxu0 0.0
    %292 = vmatprep.subr.mxu0 0.0
    %293 = vmatpush1.msra.mxu0 0.0
    %294 = vmatprep.subr.mxu0 0.0
    %295 = vmatpush1.msra.mxu0 0.0
    %296 = vmatprep.subr.mxu0 0.0
    %297 = vmatpush1.msra.mxu0 0.0
    %298 = vmatprep.subr.mxu0 0.0
    %299 = vmatpush1.msra.mxu0 0.0
    %300 = vmatprep.subr.mxu0 0.0
    %301 = vmatpush1.msra.mxu0 0.0
    %302 = vmatprep.subr.mxu0 0.0
    %303 = vmatpush1.msra.mxu0 0.0
    %304 = vmatprep.subr.mxu0 0.0
    %305 = vmatpush1.msra.mxu0 0.0
    %306 = vmatprep.subr.mxu0 0.0
    %307 = vmatpush1.msra.mxu0 0.0
    %308 = vmatprep.subr.mxu0 0.0
    %309 = vmatpush1.msra.mxu0 0.0
    %310 = vmatprep.subr.mxu0 0.0
    %311 = vmatpush1.msra.mxu0 0.0
    %312 = vmatprep.mubr.f32.mxu0 0.0
    %v313 = vand.u32 %v49, 4294901760
    %314 = vmatmul.mubr.f32.gmra.mrb[0].mxu0 %v313
    %v315 = vpop.f32.mrb[0].mxu0
    %v316 = vadd.f32 %v155, %v315
    %v317 = vpop.f32.mrb[0].mxu0
    %318 = vmatprep.mubr.f32.mxu0 0.0
    %v319 = vand.u32 %v50, 4294901760
    %320 = vmatmul.mubr.f32.gmra.mrb[0].mxu0 %v319
    %v321 = vpop.f32.mrb[0].mxu0
    %v322 = vadd.f32 %v165, %v321
    %v323 = vpop.f32.mrb[0].mxu0
    %324 = vdwg.mxu0
    %325 = vmatprep.subr.mxu0 0.0
    %v326 = vand.u32 %v51, 4294901760
    %v327 = vsub.f32 %v51, %v326
    %328 = vmatpush1.msra.mxu0 %v327
    %329 = vmatprep.subr.mxu0 0.0
    %v330 = vand.u32 %v52, 4294901760
    %v331 = vsub.f32 %v52, %v330
    %332 = vmatpush1.msra.mxu0 %v331
    %333 = vmatprep.subr.mxu0 0.0
    %v334 = vand.u32 %v53, 4294901760
    %v335 = vsub.f32 %v53, %v334
    %336 = vmatpush1.msra.mxu0 %v335
    %337 = vmatprep.subr.mxu0 0.0
    %v338 = vand.u32 %v54, 4294901760
    %v339 = vsub.f32 %v54, %v338
    %340 = vmatpush1.msra.mxu0 %v339
    %341 = vmatprep.subr.mxu0 0.0
    %v342 = vand.u32 %v55, 4294901760
    %v343 = vsub.f32 %v55, %v342
    %344 = vmatpush1.msra.mxu0 %v343
    %345 = vmatprep.subr.mxu0 0.0
    %v346 = vand.u32 %v56, 4294901760
    %v347 = vsub.f32 %v56, %v346
    %348 = vmatpush1.msra.mxu0 %v347
    %349 = vmatprep.subr.mxu0 0.0
    %v350 = vand.u32 %v57, 4294901760
    %v351 = vsub.f32 %v57, %v350
    %352 = vmatpush1.msra.mxu0 %v351
    %353 = vmatprep.subr.mxu0 0.0
    %v354 = vand.u32 %v58, 4294901760
    %v355 = vsub.f32 %v58, %v354
    %356 = vmatpush1.msra.mxu0 %v355
    %357 = vmatprep.subr.mxu0 0.0
    %v358 = vand.u32 %v59, 4294901760
    %v359 = vsub.f32 %v59, %v358
    %360 = vmatpush1.msra.mxu0 %v359
    %361 = vmatprep.subr.mxu0 0.0
    %v362 = vand.u32 %v60, 4294901760
    %v363 = vsub.f32 %v60, %v362
    %364 = vmatpush1.msra.mxu0 %v363
    %365 = vmatprep.subr.mxu0 0.0
    %v366 = vand.u32 %v61, 4294901760
    %v367 = vsub.f32 %v61, %v366
    %368 = vmatpush1.msra.mxu0 %v367
    %369 = vmatprep.subr.mxu0 0.0
    %v370 = vand.u32 %v62, 4294901760
    %v371 = vsub.f32 %v62, %v370
    %372 = vmatpush1.msra.mxu0 %v371
    %373 = vmatprep.subr.mxu0 0.0
    %v374 = vand.u32 %v63, 4294901760
    %v375 = vsub.f32 %v63, %v374
    %376 = vmatpush1.msra.mxu0 %v375
    %377 = vmatprep.subr.mxu0 0.0
    %v378 = vand.u32 %v64, 4294901760
    %v379 = vsub.f32 %v64, %v378
    %380 = vmatpush1.msra.mxu0 %v379
    %381 = vmatprep.subr.mxu0 0.0
    %v382 = vand.u32 %v65, 4294901760
    %v383 = vsub.f32 %v65, %v382
    %384 = vmatpush1.msra.mxu0 %v383
    %385 = vmatprep.subr.mxu0 0.0
    %v386 = vand.u32 %v66, 4294901760
    %v387 = vsub.f32 %v66, %v386
    %388 = vmatpush1.msra.mxu0 %v387
    %389 = vmatprep.subr.mxu0 0.0
    %390 = vmatpush1.msra.mxu0 0.0
    %391 = vmatprep.subr.mxu0 0.0
    %392 = vmatpush1.msra.mxu0 0.0
    %393 = vmatprep.subr.mxu0 0.0
    %394 = vmatpush1.msra.mxu0 0.0
    %395 = vmatprep.subr.mxu0 0.0
    %396 = vmatpush1.msra.mxu0 0.0
    %397 = vmatprep.subr.mxu0 0.0
    %398 = vmatpush1.msra.mxu0 0.0
    %399 = vmatprep.subr.mxu0 0.0
    %400 = vmatpush1.msra.mxu0 0.0
    %401 = vmatprep.subr.mxu0 0.0
    %402 = vmatpush1.msra.mxu0 0.0
    %403 = vmatprep.subr.mxu0 0.0
    %404 = vmatpush1.msra.mxu0 0.0
    %405 = vmatprep.subr.mxu0 0.0
    %406 = vmatpush1.msra.mxu0 0.0
    %407 = vmatprep.subr.mxu0 0.0
    %408 = vmatpush1.msra.mxu0 0.0
    %409 = vmatprep.subr.mxu0 0.0
    %410 = vmatpush1.msra.mxu0 0.0
    %411 = vmatprep.subr.mxu0 0.0
    %412 = vmatpush1.msra.mxu0 0.0
    %413 = vmatprep.subr.mxu0 0.0
    %414 = vmatpush1.msra.mxu0 0.0
    %415 = vmatprep.subr.mxu0 0.0
    %416 = vmatpush1.msra.mxu0 0.0
    %417 = vmatprep.subr.mxu0 0.0
    %418 = vmatpush1.msra.mxu0 0.0
    %419 = vmatprep.subr.mxu0 0.0
    %420 = vmatpush1.msra.mxu0 0.0
    %421 = vmatprep.mubr.f32.mxu0 0.0
    %v422 = vand.u32 %v49, 4294901760
    %v423 = vsub.f32 %v49, %v422
    %424 = vmatmul.mubr.f32.gmra.mrb[0].mxu0 %v423
    %v425 = vpop.f32.mrb[0].mxu0
    %v426 = vadd.f32 %v316, %v425
    %v427 = vpop.f32.mrb[0].mxu0
    %428 = vmatprep.mubr.f32.mxu0 0.0
    %v429 = vand.u32 %v50, 4294901760
    %v430 = vsub.f32 %v50, %v429
    %431 = vmatmul.mubr.f32.gmra.mrb[0].mxu0 %v430
    %v432 = vpop.f32.mrb[0].mxu0
    %v433 = vadd.f32 %v322, %v432
    %v434 = vpop.f32.mrb[0].mxu0
    %435 = vdwg.mxu0
    %436 = vmatprep.subr.mxu0 0.0
    %v437 = vand.u32 %v51, 4294901760
    %438 = vmatpush1.msra.mxu0 %v437
    %439 = vmatprep.subr.mxu0 0.0
    %v440 = vand.u32 %v52, 4294901760
    %441 = vmatpush1.msra.mxu0 %v440
    %442 = vmatprep.subr.mxu0 0.0
    %v443 = vand.u32 %v53, 4294901760
    %444 = vmatpush1.msra.mxu0 %v443
    %445 = vmatprep.subr.mxu0 0.0
    %v446 = vand.u32 %v54, 4294901760
    %447 = vmatpush1.msra.mxu0 %v446
    %448 = vmatprep.subr.mxu0 0.0
    %v449 = vand.u32 %v55, 4294901760
    %450 = vmatpush1.msra.mxu0 %v449
    %451 = vmatprep.subr.mxu0 0.0
    %v452 = vand.u32 %v56, 4294901760
    %453 = vmatpush1.msra.mxu0 %v452
    %454 = vmatprep.subr.mxu0 0.0
    %v455 = vand.u32 %v57, 4294901760
    %456 = vmatpush1.msra.mxu0 %v455
    %457 = vmatprep.subr.mxu0 0.0
    %v458 = vand.u32 %v58, 4294901760
    %459 = vmatpush1.msra.mxu0 %v458
    %460 = vmatprep.subr.mxu0 0.0
    %v461 = vand.u32 %v59, 4294901760
    %462 = vmatpush1.msra.mxu0 %v461
    %463 = vmatprep.subr.mxu0 0.0
    %v464 = vand.u32 %v60, 4294901760
    %465 = vmatpush1.msra.mxu0 %v464
    %466 = vmatprep.subr.mxu0 0.0
    %v467 = vand.u32 %v61, 4294901760
    %468 = vmatpush1.msra.mxu0 %v467
    %469 = vmatprep.subr.mxu0 0.0
    %v470 = vand.u32 %v62, 4294901760
    %471 = vmatpush1.msra.mxu0 %v470
    %472 = vmatprep.subr.mxu0 0.0
    %v473 = vand.u32 %v63, 4294901760
    %474 = vmatpush1.msra.mxu0 %v473
    %475 = vmatprep.subr.mxu0 0.0
    %v476 = vand.u32 %v64, 4294901760
    %477 = vmatpush1.msra.mxu0 %v476
    %478 = vmatprep.subr.mxu0 0.0
    %v479 = vand.u32 %v65, 4294901760
    %480 = vmatpush1.msra.mxu0 %v479
    %481 = vmatprep.subr.mxu0 0.0
    %v482 = vand.u32 %v66, 4294901760
    %483 = vmatpush1.msra.mxu0 %v482
    %484 = vmatprep.subr.mxu0 0.0
    %485 = vmatpush1.msra.mxu0 0.0
    %486 = vmatprep.subr.mxu0 0.0
    %487 = vmatpush1.msra.mxu0 0.0
    %488 = vmatprep.subr.mxu0 0.0
    %489 = vmatpush1.msra.mxu0 0.0
    %490 = vmatprep.subr.mxu0 0.0
    %491 = vmatpush1.msra.mxu0 0.0
    %492 = vmatprep.subr.mxu0 0.0
    %493 = vmatpush1.msra.mxu0 0.0
    %494 = vmatprep.subr.mxu0 0.0
    %495 = vmatpush1.msra.mxu0 0.0
    %496 = vmatprep.subr.mxu0 0.0
    %497 = vmatpush1.msra.mxu0 0.0
    %498 = vmatprep.subr.mxu0 0.0
    %499 = vmatpush1.msra.mxu0 0.0
    %500 = vmatprep.subr.mxu0 0.0
    %501 = vmatpush1.msra.mxu0 0.0
    %502 = vmatprep.subr.mxu0 0.0
    %503 = vmatpush1.msra.mxu0 0.0
    %504 = vmatprep.subr.mxu0 0.0
    %505 = vmatpush1.msra.mxu0 0.0
    %506 = vmatprep.subr.mxu0 0.0
    %507 = vmatpush1.msra.mxu0 0.0
    %508 = vmatprep.subr.mxu0 0.0
    %509 = vmatpush1.msra.mxu0 0.0
    %510 = vmatprep.subr.mxu0 0.0
    %511 = vmatpush1.msra.mxu0 0.0
    %512 = vmatprep.subr.mxu0 0.0
    %513 = vmatpush1.msra.mxu0 0.0
    %514 = vmatprep.subr.mxu0 0.0
    %515 = vmatpush1.msra.mxu0 0.0
    %516 = vmatprep.mubr.f32.mxu0 0.0
    %v517 = vand.u32 %v49, 4294901760
    %v518 = vsub.f32 %v49, %v517
    %v519 = vand.u32 %v518, 4294901760
    %520 = vmatmul.mubr.f32.gmra.mrb[0].mxu0 %v519
    %v521 = vpop.f32.mrb[0].mxu0
    %v522 = vadd.f32 %v426, %v521
    %v523 = vpop.f32.mrb[0].mxu0
    %524 = vmatprep.mubr.f32.mxu0 0.0
    %v525 = vand.u32 %v50, 4294901760
    %v526 = vsub.f32 %v50, %v525
    %v527 = vand.u32 %v526, 4294901760
    %528 = vmatmul.mubr.f32.gmra.mrb[0].mxu0 %v527
    %v529 = vpop.f32.mrb[0].mxu0
    %v530 = vadd.f32 %v433, %v529
    %v531 = vpop.f32.mrb[0].mxu0
    %532 = vdwg.mxu0
    %533 = vmatprep.subr.mxu0 0.0
    %v534 = vand.u32 %v51, 4294901760
    %v535 = vsub.f32 %v51, %v534
    %v536 = vand.u32 %v535, 4294901760
    %537 = vmatpush1.msra.mxu0 %v536
    %538 = vmatprep.subr.mxu0 0.0
    %v539 = vand.u32 %v52, 4294901760
    %v540 = vsub.f32 %v52, %v539
    %v541 = vand.u32 %v540, 4294901760
    %542 = vmatpush1.msra.mxu0 %v541
    %543 = vmatprep.subr.mxu0 0.0
    %v544 = vand.u32 %v53, 4294901760
    %v545 = vsub.f32 %v53, %v544
    %v546 = vand.u32 %v545, 4294901760
    %547 = vmatpush1.msra.mxu0 %v546
    %548 = vmatprep.subr.mxu0 0.0
    %v549 = vand.u32 %v54, 4294901760
    %v550 = vsub.f32 %v54, %v549
    %v551 = vand.u32 %v550, 4294901760
    %552 = vmatpush1.msra.mxu0 %v551
    %553 = vmatprep.subr.mxu0 0.0
    %v554 = vand.u32 %v55, 4294901760
    %v555 = vsub.f32 %v55, %v554
    %v556 = vand.u32 %v555, 4294901760
    %557 = vmatpush1.msra.mxu0 %v556
    %558 = vmatprep.subr.mxu0 0.0
    %v559 = vand.u32 %v56, 4294901760
    %v560 = vsub.f32 %v56, %v559
    %v561 = vand.u32 %v560, 4294901760
    %562 = vmatpush1.msra.mxu0 %v561
    %563 = vmatprep.subr.mxu0 0.0
    %v564 = vand.u32 %v57, 4294901760
    %v565 = vsub.f32 %v57, %v564
    %v566 = vand.u32 %v565, 4294901760
    %567 = vmatpush1.msra.mxu0 %v566
    %568 = vmatprep.subr.mxu0 0.0
    %v569 = vand.u32 %v58, 4294901760
    %v570 = vsub.f32 %v58, %v569
    %v571 = vand.u32 %v570, 4294901760
    %572 = vmatpush1.msra.mxu0 %v571
    %573 = vmatprep.subr.mxu0 0.0
    %v574 = vand.u32 %v59, 4294901760
    %v575 = vsub.f32 %v59, %v574
    %v576 = vand.u32 %v575, 4294901760
    %577 = vmatpush1.msra.mxu0 %v576
    %578 = vmatprep.subr.mxu0 0.0
    %v579 = vand.u32 %v60, 4294901760
    %v580 = vsub.f32 %v60, %v579
    %v581 = vand.u32 %v580, 4294901760
    %582 = vmatpush1.msra.mxu0 %v581
    %583 = vmatprep.subr.mxu0 0.0
    %v584 = vand.u32 %v61, 4294901760
    %v585 = vsub.f32 %v61, %v584
    %v586 = vand.u32 %v585, 4294901760
    %587 = vmatpush1.msra.mxu0 %v586
    %588 = vmatprep.subr.mxu0 0.0
    %v589 = vand.u32 %v62, 4294901760
    %v590 = vsub.f32 %v62, %v589
    %v591 = vand.u32 %v590, 4294901760
    %592 = vmatpush1.msra.mxu0 %v591
    %593 = vmatprep.subr.mxu0 0.0
    %v594 = vand.u32 %v63, 4294901760
    %v595 = vsub.f32 %v63, %v594
    %v596 = vand.u32 %v595, 4294901760
    %597 = vmatpush1.msra.mxu0 %v596
    %598 = vmatprep.subr.mxu0 0.0
    %v599 = vand.u32 %v64, 4294901760
    %v600 = vsub.f32 %v64, %v599
    %v601 = vand.u32 %v600, 4294901760
    %602 = vmatpush1.msra.mxu0 %v601
    %603 = vmatprep.subr.mxu0 0.0
    %v604 = vand.u32 %v65, 4294901760
    %v605 = vsub.f32 %v65, %v604
    %v606 = vand.u32 %v605, 4294901760
    %607 = vmatpush1.msra.mxu0 %v606
    %608 = vmatprep.subr.mxu0 0.0
    %v609 = vand.u32 %v66, 4294901760
    %v610 = vsub.f32 %v66, %v609
    %v611 = vand.u32 %v610, 4294901760
    %612 = vmatpush1.msra.mxu0 %v611
    %613 = vmatprep.subr.mxu0 0.0
    %614 = vmatpush1.msra.mxu0 0.0
    %615 = vmatprep.subr.mxu0 0.0
    %616 = vmatpush1.msra.mxu0 0.0
    %617 = vmatprep.subr.mxu0 0.0
    %618 = vmatpush1.msra.mxu0 0.0
    %619 = vmatprep.subr.mxu0 0.0
    %620 = vmatpush1.msra.mxu0 0.0
    %621 = vmatprep.subr.mxu0 0.0
    %622 = vmatpush1.msra.mxu0 0.0
    %623 = vmatprep.subr.mxu0 0.0
    %624 = vmatpush1.msra.mxu0 0.0
    %625 = vmatprep.subr.mxu0 0.0
    %626 = vmatpush1.msra.mxu0 0.0
    %627 = vmatprep.subr.mxu0 0.0
    %628 = vmatpush1.msra.mxu0 0.0
    %629 = vmatprep.subr.mxu0 0.0
    %630 = vmatpush1.msra.mxu0 0.0
    %631 = vmatprep.subr.mxu0 0.0
    %632 = vmatpush1.msra.mxu0 0.0
    %633 = vmatprep.subr.mxu0 0.0
    %634 = vmatpush1.msra.mxu0 0.0
    %635 = vmatprep.subr.mxu0 0.0
    %636 = vmatpush1.msra.mxu0 0.0
    %637 = vmatprep.subr.mxu0 0.0
    %638 = vmatpush1.msra.mxu0 0.0
    %639 = vmatprep.subr.mxu0 0.0
    %640 = vmatpush1.msra.mxu0 0.0
    %641 = vmatprep.subr.mxu0 0.0
    %642 = vmatpush1.msra.mxu0 0.0
    %643 = vmatprep.subr.mxu0 0.0
    %644 = vmatpush1.msra.mxu0 0.0
    %645 = vmatprep.mubr.f32.mxu0 0.0
    %v646 = vand.u32 %v49, 4294901760
    %647 = vmatmul.mubr.f32.gmra.mrb[0].mxu0 %v646
    %v648 = vpop.f32.mrb[0].mxu0
    %v649 = vadd.f32 %v522, %v648
    %v650 = vpop.f32.mrb[0].mxu0
    %651 = vmatprep.mubr.f32.mxu0 0.0
    %v652 = vand.u32 %v50, 4294901760
    %653 = vmatmul.mubr.f32.gmra.mrb[0].mxu0 %v652
    %v654 = vpop.f32.mrb[0].mxu0
    %v655 = vadd.f32 %v530, %v654
    %v656 = vpop.f32.mrb[0].mxu0
    %657 = vdwg.mxu0
    %658 = vmatprep.subr.mxu0 0.0
    %v659 = vand.u32 %v51, 4294901760
    %660 = vmatpush1.msra.mxu0 %v659
    %661 = vmatprep.subr.mxu0 0.0
    %v662 = vand.u32 %v52, 4294901760
    %663 = vmatpush1.msra.mxu0 %v662
    %664 = vmatprep.subr.mxu0 0.0
    %v665 = vand.u32 %v53, 4294901760
    %666 = vmatpush1.msra.mxu0 %v665
    %667 = vmatprep.subr.mxu0 0.0
    %v668 = vand.u32 %v54, 4294901760
    %669 = vmatpush1.msra.mxu0 %v668
    %670 = vmatprep.subr.mxu0 0.0
    %v671 = vand.u32 %v55, 4294901760
    %672 = vmatpush1.msra.mxu0 %v671
    %673 = vmatprep.subr.mxu0 0.0
    %v674 = vand.u32 %v56, 4294901760
    %675 = vmatpush1.msra.mxu0 %v674
    %676 = vmatprep.subr.mxu0 0.0
    %v677 = vand.u32 %v57, 4294901760
    %678 = vmatpush1.msra.mxu0 %v677
    %679 = vmatprep.subr.mxu0 0.0
    %v680 = vand.u32 %v58, 4294901760
    %681 = vmatpush1.msra.mxu0 %v680
    %682 = vmatprep.subr.mxu0 0.0
    %v683 = vand.u32 %v59, 4294901760
    %684 = vmatpush1.msra.mxu0 %v683
    %685 = vmatprep.subr.mxu0 0.0
    %v686 = vand.u32 %v60, 4294901760
    %687 = vmatpush1.msra.mxu0 %v686
    %688 = vmatprep.subr.mxu0 0.0
    %v689 = vand.u32 %v61, 4294901760
    %690 = vmatpush1.msra.mxu0 %v689
    %691 = vmatprep.subr.mxu0 0.0
    %v692 = vand.u32 %v62, 4294901760
    %693 = vmatpush1.msra.mxu0 %v692
    %694 = vmatprep.subr.mxu0 0.0
    %v695 = vand.u32 %v63, 4294901760
    %696 = vmatpush1.msra.mxu0 %v695
    %697 = vmatprep.subr.mxu0 0.0
    %v698 = vand.u32 %v64, 4294901760
    %699 = vmatpush1.msra.mxu0 %v698
    %700 = vmatprep.subr.mxu0 0.0
    %v701 = vand.u32 %v65, 4294901760
    %702 = vmatpush1.msra.mxu0 %v701
    %703 = vmatprep.subr.mxu0 0.0
    %v704 = vand.u32 %v66, 4294901760
    %705 = vmatpush1.msra.mxu0 %v704
    %706 = vmatprep.subr.mxu0 0.0
    %707 = vmatpush1.msra.mxu0 0.0
    %708 = vmatprep.subr.mxu0 0.0
    %709 = vmatpush1.msra.mxu0 0.0
    %710 = vmatprep.subr.mxu0 0.0
    %711 = vmatpush1.msra.mxu0 0.0
    %712 = vmatprep.subr.mxu0 0.0
    %713 = vmatpush1.msra.mxu0 0.0
    %714 = vmatprep.subr.mxu0 0.0
    %715 = vmatpush1.msra.mxu0 0.0
    %716 = vmatprep.subr.mxu0 0.0
    %717 = vmatpush1.msra.mxu0 0.0
    %718 = vmatprep.subr.mxu0 0.0
    %719 = vmatpush1.msra.mxu0 0.0
    %720 = vmatprep.subr.mxu0 0.0
    %721 = vmatpush1.msra.mxu0 0.0
    %722 = vmatprep.subr.mxu0 0.0
    %723 = vmatpush1.msra.mxu0 0.0
    %724 = vmatprep.subr.mxu0 0.0
    %725 = vmatpush1.msra.mxu0 0.0
    %726 = vmatprep.subr.mxu0 0.0
    %727 = vmatpush1.msra.mxu0 0.0
    %728 = vmatprep.subr.mxu0 0.0
    %729 = vmatpush1.msra.mxu0 0.0
    %730 = vmatprep.subr.mxu0 0.0
    %731 = vmatpush1.msra.mxu0 0.0
    %732 = vmatprep.subr.mxu0 0.0
    %733 = vmatpush1.msra.mxu0 0.0
    %734 = vmatprep.subr.mxu0 0.0
    %735 = vmatpush1.msra.mxu0 0.0
    %736 = vmatprep.subr.mxu0 0.0
    %737 = vmatpush1.msra.mxu0 0.0
    %738 = vmatprep.mubr.f32.mxu0 0.0
    %v739 = vand.u32 %v49, 4294901760
    %740 = vmatmul.mubr.f32.gmra.mrb[0].mxu0 %v739
    %v741 = vpop.f32.mrb[0].mxu0
    %v742 = vadd.f32 %v649, %v741
    %v743 = vpop.f32.mrb[0].mxu0
    %744 = vmatprep.mubr.f32.mxu0 0.0
    %v745 = vand.u32 %v50, 4294901760
    %746 = vmatmul.mubr.f32.gmra.mrb[0].mxu0 %v745
    %v747 = vpop.f32.mrb[0].mxu0
    %v748 = vadd.f32 %v655, %v747
    %v749 = vpop.f32.mrb[0].mxu0
    %750 = vdwg.mxu0
    %v751 = vld [vmem:[%s3] sm:$0xff]
    %v752 = vadd.f32 %v742, %v751
    %v753 = vadd.f32 %v748, %v751
    %754 = vst [vmem:[#allocation5] sm:$0xff] %v752
    %755 = vst [vmem:[#allocation5 + $0x8] sm:$0xff] %v753
    %v756 = vld [vmem:[%s1] sm:$0xff]
    %v757 = vld [vmem:[%s1 + $0x8] sm:$0xff]
    %758 = vmax.xlane.f32.xlu0 %v752
    %v759 = vpop.xlane.xlu0 %758
    %760 = vmax.xlane.f32.xlu0 %v753
    %v761 = vpop.xlane.xlu0 %760
    %v762 = vsub.f32 %v752, %v759
    %v763 = vsub.f32 %v753, %v761
    %v764 = vmul.f32 %v762, 1.442695
    %v765 = vpow.pop %v764
    %v766 = vmul.f32 %v763, 1.442695
    %v767 = vpow.pop %v766
    %768 = vadd.xlane.f32.xlu0 %v765
    %v769 = vpop.xlane.xlu0 %768
    %770 = vadd.xlane.f32.xlu0 %v767
    %v771 = vpop.xlane.xlu0 %770
    %v772 = vlog2.pop %v769
    %v773 = vmul.f32 %v772, 0.6931472
    %v774 = vlog2.pop %v771
    %v775 = vmul.f32 %v774, 0.6931472
    %v776 = vadd.f32 %v759, %v773
    %v777 = vadd.f32 %v761, %v775
    %778 = vset.pattern.permute.xlu0 0
    %779 = vperm.xlu0 %778, %v756
    %v780 = vpop.permute.xlu0 %779
    %781 = vset.pattern.permute.xlu0 0
    %782 = vperm.xlu0 %781, %v757
    %v783 = vpop.permute.xlu0 %782
    %vm784 = vcmp.eq.s32.totalorder %v38, %v780
    %vm785 = vcmp.eq.s32.totalorder %v38, %v783
    %v786 = vsel %vm784, %v752, 0.0
    %v787 = vsel %vm785, %v753, 0.0
    %788 = vadd.xlane.f32.xlu0 %v786
    %v789 = vpop.xlane.xlu0 %788
    %790 = vadd.xlane.f32.xlu0 %v787
    %v791 = vpop.xlane.xlu0 %790
    %v792 = vsub.f32 %v776, %v789
    %v793 = vsub.f32 %v777, %v791
    %vm794 = vcmask 7168
    %v795 = vsel %vm794, %v792, 0.0
    %v796 = vsel %vm794, %v793, 0.0
    %v797 = vadd.f32 %v795, %v796
    %798 = vadd.xlane.f32.xlu0 %v797
    %v799 = vpop.xlane.xlu0 %798
    %v800 = vrot.slane %v799, 4
    %v801 = vadd.f32 %v799, %v800
    %v802 = vrot.slane %v801, 2
    %v803 = vadd.f32 %v801, %v802
    %v804 = vrot.slane %v803, 1
    %v805 = vadd.f32 %v803, %v804
    %s806 = vtos %v805
    %v807 = vstv %s806
    %808 = vst [vmem:[#allocation6] sm:$0xff] %v807
    // Predicated region
    $region22: #{tpu_custom_call.1} parent=1 // pred_check
      _
    $region23: #{tpu_custom_call.1} parent=1 // pred_check_branch
      %810 = sbr.rel (0) target = $region25
    $region24: #{tpu_custom_call.1} parent=1 // pred_region
      %s812 = ssub.s32 256, 256
      %813 = vsyncadd [#allocation4], %s812
      %s814 = sshll.u32 [#allocation5], 4
      %s815 = int_to_ptr.vmem [resolvable:$true] %s814
      %820 = dma.vmem_to_hbm [thread:$0]  %s815, 256, %s4, [#allocation4], 128, 128, 8
    $region25: #{tpu_custom_call.1} parent=1 // pred_fallthru
      _
    // Predicated region
    $region26: #{tpu_custom_call.1} parent=1 // pred_check
      _
    $region27: #{tpu_custom_call.1} parent=1 // pred_check_branch
      %822 = sbr.rel (0) target = $region29
    $region28: #{tpu_custom_call.1} parent=1 // pred_region
      %s824 = ssub.s32 128, 128
      %825 = vsyncadd [#allocation7], %s824
      %s827 = sshll.u32 [#allocation6], 4
      %s828 = int_to_ptr.vmem [resolvable:$true] %s827
      %830 = dma.vmem_to_hbm [thread:$0]  %s828, 128, %s5, [#allocation7]
    $region29: #{tpu_custom_call.1} parent=1 // pred_fallthru
      _
    // Predicated region
    $region30: #{tpu_custom_call.1} parent=1 // pred_check
      _
    $region31: #{tpu_custom_call.1} parent=1 // pred_check_branch
      %832 = sbr.rel (0) target = $region33
    $region32: #{tpu_custom_call.1} parent=1 // pred_region
      %833 = dma.done [#allocation4], 256
    $region33: #{tpu_custom_call.1} parent=1 // pred_fallthru
      _
    // Predicated region
    $region34: #{tpu_custom_call.1} parent=1 // pred_check
      _
    $region35: #{tpu_custom_call.1} parent=1 // pred_check_branch
      %835 = sbr.rel (0) target = $region37
    $region36: #{tpu_custom_call.1} parent=1 // pred_region
      %836 = dma.done [#allocation7], 128
    $region37: #{tpu_custom_call.1} parent=1 // pred_fallthru
      _
    %837 = vsyncpa [#allocation3], 1
    %838 = vsyncpa [#allocation4], 1
    %839 = vsyncpa [#allocation7], 1

</llo_original>
